<compile_context>
chip_gen: v7x
topology: tpu7x:2x2x1
jax: 0.10.0
libtpu: 0.0.40
codegen_flags: <defaults>
</compile_context>

<pallas_src>
import functools

import jax
import jax.numpy as jnp
from jax.experimental import pallas as pl
from jax.experimental.pallas import tpu as pltpu


def _round_up(x, m):
    return (x + m - 1) // m * m


def _vmem_capacity_bytes():
    """Physical per-core VMEM; falls back to the smallest current chip (v7x: 64 MiB)."""
    try:
        cap = getattr(pltpu.get_tpu_info(), "vmem_capacity_bytes", None)
        if cap:
            return int(cap)
    except Exception:
        pass
    return 64 << 20


def timeblock_kernel(x_ref, w_ref, b_ref, out_ref, *, p_width, q_offset,
                     approx_gate):
    """One MXU matmul per tile; conv1 || conv2 || residual all live in w_ref.

    x_ref:   (tm, T*C_in)          lane-dense input rows
    w_ref:   (T*C_in, P_pad + P)   banded fused weights (p half, then q half)
    b_ref:   (1, P_pad + P)        fused per-lane biases
    out_ref: (tm, T_out*C_out)     lane-dense output slab
    """
    x = x_ref[...].astype(jnp.float32)
    big = jnp.dot(x, w_ref[...], preferred_element_type=jnp.float32)
    big = big + b_ref[...]
    p = big[:, :p_width]                      # conv1 output + folded residual
    q = big[:, q_offset:q_offset + p_width]   # conv2 output (gate), vreg-aligned
    # sigmoid(q) = 1 / (1 + exp(-q)); exp goes to the EUP slot, and with
    # approx_gate=True the reciprocal stays on the EUP as well (small numerics
    # change, hence the flag).
    gate = pl.reciprocal(1.0 + jnp.exp(-q), approx=approx_gate)
    out_ref[...] = (p * gate).astype(out_ref.dtype)


def _conv_band(w, T, T_out):
    """(K, C_in, C_out) conv taps -> dense banded (T*C_in, T_out*C_out)."""
    K, C_in, C_out = w.shape
    band = jnp.zeros((T, C_in, T_out, C_out), jnp.float32)
    w = w.astype(jnp.float32)
    for t in range(T_out):                    # static trace-time loop (small)
        band = band.at[t:t + K, :, t, :].set(w)
    return band.reshape(T * C_in, T_out * C_out)


def time_block(x, w1, b1, w2, b2, *, kernel_size, tile_m=2048,
               vmem_budget_bytes=40 * 1024 * 1024,
               transport_dtype=None, approx_gate=False):
    """x: (B, N, T, C_in) -> (B, N, T - K + 1, C_out).

    Conv weights are (K, C_in, C_out) (torch weight (O, I, 1, K) transposed to
    (K, I, O)).  `transport_dtype=jnp.bfloat16` halves x's HBM read traffic and
    `approx_gate=True` keeps the gate divide on the EUP — both change numerics
    slightly and are off by default.
    """
    B, N, T, C_in = x.shape
    K = kernel_size
    C_out = w1.shape[-1]
    assert C_in <= C_out          # torch residual add only broadcasts this way
    assert T >= K
    T_out = T - K + 1
    P = T_out * C_out                    # real output lane width
    P_pad = _round_up(P, 128)            # vreg-aligned offset of the q half
    W_cols = P_pad + P                   # dead columns after the q half trimmed
    in_lanes = T * C_in
    M = B * N

    # ---- fold residual into conv1's k=0 tap, fuse conv1/conv2, band over T ----
    ident = jnp.zeros((C_in, C_out), jnp.float32).at[:, :C_in].set(
        jnp.eye(C_in, dtype=jnp.float32))
    w1_eff = w1.astype(jnp.float32).at[0].add(ident)   # residual == k=0 window
    W_p = _conv_band(w1_eff, T, T_out)                 # (T*C_in, P)
    W_q = _conv_band(w2, T, T_out)                     # (T*C_in, P)
    W_pq = (jnp.zeros((in_lanes, W_cols), jnp.float32)
            .at[:, :P].set(W_p)
            .at[:, P_pad:P_pad + P].set(W_q))
    b_pq = (jnp.zeros((1, W_cols), jnp.float32)
            .at[0, :P].set(jnp.tile(b1.astype(jnp.float32), T_out))
            .at[0, P_pad:P_pad + P].set(jnp.tile(b2.astype(jnp.float32), T_out)))

    # ---- tile sizing against a corrected VMEM model (v5e/v6e: 128 MiB, v7x: 64) ----
    vmem_cap = _vmem_capacity_bytes()
    vmem_budget = min(vmem_budget_bytes, int(0.6 * vmem_cap))
    x_itemsize = jnp.dtype(transport_dtype if transport_dtype is not None
                           else x.dtype).itemsize
    in_lanes_pad = _round_up(in_lanes, 128)   # VMEM lane-pads sub-128 minor dims
    out_lanes_pad = _round_up(P, 128)
    mid_lanes_pad = _round_up(W_cols, 128)
    w_bytes = 2 * (W_pq.size + b_pq.size) * 4           # resident weights (dbl-buf)

    def tile_vmem(tm):
        io = tm * (2 * in_lanes_pad * x_itemsize + 2 * out_lanes_pad * 4)
        mid = tm * (mid_lanes_pad + 2 * out_lanes_pad) * 4   # matmul result + temps
        return w_bytes + io + mid

    tm = max(8, _round_up(min(tile_m, M), 8))
    while tm > 8 and tile_vmem(tm) > vmem_budget:
        tm = max(8, _round_up(tm // 2, 8))

    # Guarantee >=2 (ideally 4) grid steps when M is big enough, so the single
    # "parallel" axis can shard across v7x's two TensorCores.  Never shrink
    # below ~512 rows just to split (per-step overhead ~0.35 us).
    min_split_tile = 512
    if M >= 2 * min_split_tile:
        target_steps = 4 if M >= 4 * min_split_tile else 2
        tm = min(tm, max(min_split_tile, _round_up(-(-M // target_steps), 8)))

    M_pad = _round_up(M, tm)           # pad M instead of asserting divisibility
    grid_m = M_pad // tm

    # Compiled VMEM limit: generation-aware, with headroom, never below the
    # budget used to size tm (so a large caller budget can't out-run the limit).
    vmem_limit = min(vmem_cap - (2 << 20), vmem_budget + (16 << 20))
    vmem_limit = max(vmem_limit, vmem_budget + (2 << 20))

    x2 = x.reshape(M, in_lanes)        # lane-dense input layout
    if transport_dtype is not None:
        x2 = x2.astype(transport_dtype)
    if M_pad > M:
        x2 = jnp.pad(x2, ((0, M_pad - M), (0, 0)))

    kern = functools.partial(timeblock_kernel, p_width=P, q_offset=P_pad,
                             approx_gate=approx_gate)
    out = pl.pallas_call(
        kern,
        out_shape=jax.ShapeDtypeStruct((M_pad, P), x.dtype),
        grid_spec=pltpu.PrefetchScalarGridSpec(
            num_scalar_prefetch=0,
            grid=(grid_m,),
            in_specs=[
                pl.BlockSpec((tm, in_lanes), lambda i: (i, 0)),
                pl.BlockSpec((in_lanes, W_cols), lambda i: (0, 0)),  # resident
                pl.BlockSpec((1, W_cols), lambda i: (0, 0)),         # resident
            ],
            out_specs=pl.BlockSpec((tm, P), lambda i: (i, 0)),
        ),
        compiler_params=pltpu.CompilerParams(
            dimension_semantics=("parallel",),
            vmem_limit_bytes=int(vmem_limit)),
    )(x2, W_pq, b_pq)

    return out[:M].reshape(B, N, T_out, C_out)


def time_block_reference(x, w1, b1, w2, b2, *, kernel_size):
    """Pure-JAX reference replicating the torch forward semantics."""
    B, N, T, C_in = x.shape
    C_out = w1.shape[-1]
    T_out = T - kernel_size + 1

    def conv(w, b):
        acc = jnp.zeros((B, N, T_out, C_out), jnp.float32)
        for k in range(kernel_size):
            acc = acc + jnp.einsum('bntc,cd->bntd',
                                   x[:, :, k:k + T_out, :].astype(jnp.float32),
                                   w[k].astype(jnp.float32))
        return acc + b.reshape(1, 1, 1, C_out)

    x_p = conv(w1, b1)
    x_q = conv(w2, b2)
    x_res = x[:, :, :T_out, :].astype(jnp.float32)
    if C_in < C_out:
        x_res = jnp.pad(x_res, ((0, 0), (0, 0), (0, 0), (0, C_out - C_in)))
    return (x_res + x_p) * jax.nn.sigmoid(x_q)


if __name__ == "__main__":
    # X: (batch=2, num_nodes=4, num_timesteps=8, in_channels=4), C_out=8, K=3
    B, N, T, C_in, C_out, K = 2, 4, 8, 4, 8, 3

    key = jax.random.PRNGKey(0)
    kx, k1, k2, k3, k4 = jax.random.split(key, 5)
    x = jax.random.normal(kx, (B, N, T, C_in), jnp.float32)
    scale = 1.0 / (C_in * K) ** 0.5          # conv-like fan-in scale
    w1 = jax.random.normal(k1, (K, C_in, C_out), jnp.float32) * scale
    b1 = jax.random.normal(k2, (C_out,), jnp.float32) * scale
    w2 = jax.random.normal(k3, (K, C_in, C_out), jnp.float32) * scale
    b2 = jax.random.normal(k4, (C_out,), jnp.float32) * scale

    out = jax.jit(functools.partial(time_block, kernel_size=K))(x, w1, b1, w2, b2)
    out = jax.block_until_ready(out)

    ref = time_block_reference(x, w1, b1, w2, b2, kernel_size=K)
    assert out.shape == (B, N, T - K + 1, C_out)
    assert jnp.allclose(out, ref, atol=1e-4, rtol=1e-4), "mismatch vs reference"
    print("KERNEL_OK")
</pallas_src>

<mosaic_0001>
module attributes {stable_mosaic.version = 11 : i64} {
  func.func @timeblock_kernel(%arg0: i32, %arg1: memref<8x32xf32, #tpu.memory_space<vmem>>, %arg2: memref<32x176xf32, #tpu.memory_space<vmem>>, %arg3: memref<1x176xf32, #tpu.memory_space<vmem>>, %arg4: memref<8x48xf32, #tpu.memory_space<vmem>>) attributes {dimension_semantics = [#tpu.dimension_semantics<parallel>], iteration_bounds = array<i64: 1>, scalar_prefetch = 0 : i64, scratch_operands = 0 : i64, tpu.core_type = #tpu.core_type<tc>, window_params = [{transform_indices = @transform_0, window_bounds = array<i64: 8, 32>}, {pipeline_mode = #tpu.pipeline_mode<synchronous>, transform_indices = @transform_1, window_bounds = array<i64: 32, 176>}, {pipeline_mode = #tpu.pipeline_mode<synchronous>, transform_indices = @transform_2, window_bounds = array<i64: 1, 176>}, {transform_indices = @transform_3, window_bounds = array<i64: 8, 48>}]} {
    %c0 = arith.constant 0 : index
    %c0_0 = arith.constant 0 : index
    %0 = vector.load %arg1[%c0, %c0_0] : memref<8x32xf32, #tpu.memory_space<vmem>>, vector<8x32xf32>
    %c0_1 = arith.constant 0 : index
    %c0_2 = arith.constant 0 : index
    %1 = vector.load %arg2[%c0_1, %c0_2] : memref<32x176xf32, #tpu.memory_space<vmem>>, vector<32x176xf32>
    %cst = arith.constant dense<0.000000e+00> : vector<8x176xf32>
    %2 = tpu.matmul %0, %1, %cst {dimension_numbers = #tpu.dot_dimension_numbers<[1], [0], [0], [1], [0, 0, 1, 1], [], []>} : vector<8x32xf32>, vector<32x176xf32>, vector<8x176xf32> -> vector<8x176xf32>
    %c0_3 = arith.constant 0 : index
    %c0_4 = arith.constant 0 : index
    %3 = vector.load %arg3[%c0_3, %c0_4] : memref<1x176xf32, #tpu.memory_space<vmem>>, vector<1x176xf32>
    %4 = vector.broadcast %3 : vector<1x176xf32> to vector<8x176xf32>
    %5 = arith.addf %2, %4 : vector<8x176xf32>
    %6 = vector.extract_strided_slice %5 {offsets = [0, 0], sizes = [8, 48], strides = [1, 1]} : vector<8x176xf32> to vector<8x48xf32>
    %7 = vector.extract_strided_slice %5 {offsets = [0, 128], sizes = [8, 48], strides = [1, 1]} : vector<8x176xf32> to vector<8x48xf32>
    %cst_5 = arith.constant 0.000000e+00 : f32
    %8 = vector.broadcast %cst_5 : f32 to vector<8x48xf32>
    %9 = arith.subf %8, %7 : vector<8x48xf32>
    %10 = math.exp %9 : vector<8x48xf32>
    %cst_6 = arith.constant 1.000000e+00 : f32
    %11 = vector.broadcast %cst_6 : f32 to vector<8x48xf32>
    %12 = arith.addf %11, %10 : vector<8x48xf32>
    %13 = tpu.reciprocal %12 : vector<8x48xf32> -> vector<8x48xf32>
    %14 = arith.mulf %6, %13 : vector<8x48xf32>
    %c0_7 = arith.constant 0 : index
    %c0_8 = arith.constant 0 : index
    %15 = vector.load %arg4[%c0_7, %c0_8] : memref<8x48xf32, #tpu.memory_space<vmem>>, vector<8x48xf32>
    tpu.vector_store %arg4[%c0_7, %c0_8], %14 {strides = array<i32>} : memref<8x48xf32, #tpu.memory_space<vmem>>, vector<8x48xf32>,
    return
  }
  func.func @transform_0(%arg0: i32) -> (i32, i32) {
    %c0_i32 = arith.constant 0 : i32
    %c0_i32_0 = arith.constant 0 : i32
    return %arg0, %c0_i32 : i32, i32
  }
  func.func @transform_1(%arg0: i32) -> (i32, i32) {
    %c0_i32 = arith.constant 0 : i32
    %c0_i32_0 = arith.constant 0 : i32
    %c0_i32_1 = arith.constant 0 : i32
    return %c0_i32, %c0_i32_0 : i32, i32
  }
  func.func @transform_2(%arg0: i32) -> (i32, i32) {
    %c0_i32 = arith.constant 0 : i32
    %c0_i32_0 = arith.constant 0 : i32
    %c0_i32_1 = arith.constant 0 : i32
    return %c0_i32, %c0_i32_0 : i32, i32
  }
  func.func @transform_3(%arg0: i32) -> (i32, i32) {
    %c0_i32 = arith.constant 0 : i32
    %c0_i32_0 = arith.constant 0 : i32
    return %arg0, %c0_i32 : i32, i32
  }
}

</mosaic_0001>

<llo_original>
// kernel: time_block.1
$region0: #{time_block.1}
  #allocation0 [shape = 'u32[]', space=smem, size = 0x4, offset = 0x4, fixed_abs, tag = 'smem constant byte address 0x4 - core index']
  #allocation1 [shape = 'u32[144,128]{1,0:T(1,128)}', space=vmem, size = 0x12000, scoped, tag = 'internal scratch']
  %s0 = inlined_call_operand.vmem [shape: f32[8,32], index: 0, kind: input, shape index: {}]
  %s1 = inlined_call_operand.vmem [shape: f32[32,176], index: 1, kind: input, shape index: {}]
  %s2 = inlined_call_operand.vmem [shape: f32[1,176], index: 2, kind: input, shape index: {}]
  %s3 = inlined_call_operand.vmem [shape: f32[8,48], index: 3, kind: output, shape index: {}]
  %s4 = sld [smem:[#allocation0]]
  $region22: #{time_block.1} parent=0
    _
  %s6 = ssub.s32 1, %s4
  %s7 = scalar_select 0, %s6, %s4
  // Predicated region
  $region2: #{time_block.1} parent=0 // pred_check
    _
  $region3: #{time_block.1} parent=0 // pred_check_branch
    %9 = sbr.rel (0) target = $region5
  $region4: #{time_block.1} parent=0 // pred_region
    _
  $region5: #{time_block.1} parent=0 // pred_fallthru
    _
  // Predicated region
  $region6: #{time_block.1} parent=0 // pred_check
    _
  $region7: #{time_block.1} parent=0 // pred_check_branch
    %11 = sbr.rel (0) target = $region9
  $region8: #{time_block.1} parent=0 // pred_region
    _
  $region9: #{time_block.1} parent=0 // pred_fallthru
    _
  // Predicated region
  $region10: #{time_block.1} parent=0 // pred_check
    _
  $region11: #{time_block.1} parent=0 // pred_check_branch
    %13 = sbr.rel (0) target = $region13
  $region12: #{time_block.1} parent=0 // pred_region
    _
  $region13: #{time_block.1} parent=0 // pred_fallthru
    _
  %v14 = vld [vmem:[%s0] sm:$0xff]
  %v15 = vld [vmem:[%s1] sm:$0xff]
  %v16 = vld [vmem:[%s1 + $0x8] sm:$0xff]
  %v17 = vld [vmem:[%s1 + $0x10] sm:$0xff]
  %v18 = vld [vmem:[%s1 + $0x18] sm:$0xff]
  %v19 = vld [vmem:[%s1 + $0x20] sm:$0xff]
  %v20 = vld [vmem:[%s1 + $0x28] sm:$0xff]
  %v21 = vld [vmem:[%s1 + $0x30] sm:$0xff]
  %v22 = vld [vmem:[%s1 + $0x38] sm:$0xff]
  %v23 = vld [vmem:[%s2] sm:$0x3]
  %v25 = vlaneseq
  %v26 = vshrl.u32 %v25, 7
  %v27 = vsub.s32 0, %v26
  %v28 = vrot.slane %v23, %v27
  %v29 = vlaneseq
  %v30 = vshrl.u32 %v29, 7
  %v31 = vsub.s32 1, %v30
  %v32 = vrot.slane %v23, %v31
  %vm35 = vcmask 261120
  %v37 = vsel %vm35, %v14, 0
  %39 = vmatprep.subr.mxu0 %v16
  %40 = vmatpush1.msra.mxu0 %v15
  %41 = vmatprep.subr.mxu0 %v18
  %42 = vmatpush1.msra.mxu0 %v17
  %43 = vmatprep.subr.mxu0 %v20
  %44 = vmatpush1.msra.mxu0 %v19
  %45 = vmatprep.subr.mxu0 %v22
  %46 = vmatpush1.msra.mxu0 %v21
  %47 = vmatprep.subr.mxu0 0.0
  %48 = vmatpush1.msra.mxu0 0.0
  %49 = vmatprep.subr.mxu0 0.0
  %50 = vmatpush1.msra.mxu0 0.0
  %51 = vmatprep.subr.mxu0 0.0
  %52 = vmatpush1.msra.mxu0 0.0
  %53 = vmatprep.subr.mxu0 0.0
  %54 = vmatpush1.msra.mxu0 0.0
  %55 = vmatprep.subr.mxu0 0.0
  %56 = vmatpush1.msra.mxu0 0.0
  %57 = vmatprep.subr.mxu0 0.0
  %58 = vmatpush1.msra.mxu0 0.0
  %59 = vmatprep.subr.mxu0 0.0
  %60 = vmatpush1.msra.mxu0 0.0
  %61 = vmatprep.subr.mxu0 0.0
  %62 = vmatpush1.msra.mxu0 0.0
  %63 = vmatprep.subr.mxu0 0.0
  %64 = vmatpush1.msra.mxu0 0.0
  %65 = vmatprep.subr.mxu0 0.0
  %66 = vmatpush1.msra.mxu0 0.0
  %67 = vmatprep.subr.mxu0 0.0
  %68 = vmatpush1.msra.mxu0 0.0
  %69 = vmatprep.subr.mxu0 0.0
  %70 = vmatpush1.msra.mxu0 0.0
  %71 = vmatprep.subr.mxu0 0.0
  %72 = vmatpush1.msra.mxu0 0.0
  %73 = vmatprep.subr.mxu0 0.0
  %74 = vmatpush1.msra.mxu0 0.0
  %75 = vmatprep.subr.mxu0 0.0
  %76 = vmatpush1.msra.mxu0 0.0
  %77 = vmatprep.subr.mxu0 0.0
  %78 = vmatpush1.msra.mxu0 0.0
  %79 = vmatprep.subr.mxu0 0.0
  %80 = vmatpush1.msra.mxu0 0.0
  %81 = vmatprep.subr.mxu0 0.0
  %82 = vmatpush1.msra.mxu0 0.0
  %83 = vmatprep.subr.mxu0 0.0
  %84 = vmatpush1.msra.mxu0 0.0
  %85 = vmatprep.subr.mxu0 0.0
  %86 = vmatpush1.msra.mxu0 0.0
  %87 = vmatprep.subr.mxu0 0.0
  %88 = vmatpush1.msra.mxu0 0.0
  %89 = vmatprep.subr.mxu0 0.0
  %90 = vmatpush1.msra.mxu0 0.0
  %91 = vmatprep.subr.mxu0 0.0
  %92 = vmatpush1.msra.mxu0 0.0
  %93 = vmatprep.subr.mxu0 0.0
  %94 = vmatpush1.msra.mxu0 0.0
  %95 = vmatprep.subr.mxu0 0.0
  %96 = vmatpush1.msra.mxu0 0.0
  %97 = vmatprep.subr.mxu0 0.0
  %98 = vmatpush1.msra.mxu0 0.0
  %99 = vmatprep.subr.mxu0 0.0
  %100 = vmatpush1.msra.mxu0 0.0
  %101 = vmatprep.subr.mxu0 0.0
  %102 = vmatpush1.msra.mxu0 0.0
  %103 = vmatprep.mubr.f32.mxu0 0.0
  %104 = vmatmul.mubr.f32.gmra.mrb[0].mxu0 %v37
  %v105 = vpop.f32.mrb[0].mxu0
  %v106 = vadd.f32 %v28, %v105
  %v107 = vpop.f32.mrb[0].mxu0
  %v108 = vadd.f32 %v32, %v107
  %109 = vdwg.mxu0
  %v110 = vsub.f32 0.0, %v108
  %v111 = vmul.f32 %v110, 1.442695
  %v112 = vpow.pop %v111
  %v113 = vadd.f32 %v112, 1.0
  %v114 = vrcp.pop %v113
  %v115 = vmul.f32 %v106, %v114
  %vm116 = vcmask 392192
  %117 = vst.msk [vmem:[%s3] sm:$0xff] %vm116, %v115
  // Predicated region
  $region14: #{time_block.1} parent=0 // pred_check
    _
  $region15: #{time_block.1} parent=0 // pred_check_branch
    %119 = sbr.rel (0) target = $region17
  $region16: #{time_block.1} parent=0 // pred_region
    _
  $region17: #{time_block.1} parent=0 // pred_fallthru
    _
  // Predicated region
  $region18: #{time_block.1} parent=0 // pred_check
    _
  $region19: #{time_block.1} parent=0 // pred_check_branch
    %121 = sbr.rel (0) target = $region21
  $region20: #{time_block.1} parent=0 // pred_region
    _
  $region21: #{time_block.1} parent=0 // pred_fallthru
    _

</llo_original>
